<compile_context>
chip_gen: v7x
topology: tpu7x:2x2x1
jax: 0.10.0
libtpu: 0.0.40
codegen_flags: <defaults>
</compile_context>

<pallas_src>
import functools

import jax
import jax.numpy as jnp
from jax.experimental import pallas as pl
from jax.experimental.pallas import tpu as pltpu

EPS = 1e-5        # GraphNorm eps
OUT_PAD = 128     # lane-dense output width (real output width is 2)


def _round_up(v, m):
    return (v + m - 1) // m * m


def decoder_kernel(adj_ref, am_ref, at_ref, h0_ref, prm_ref, out_ref,
                   *, H1, H2, w2_row, wfb_row):
    f32 = jnp.float32
    bf16 = jnp.bfloat16

    adj = adj_ref[...]                      # (N, N)  bf16 (cast in wrapper)
    am = am_ref[...].astype(bf16)           # (G, N)  assign * inv_counts
    at = at_ref[...].astype(bf16)           # (N, G)  assign^T
    prm = prm_ref[...]                      # (R, PW) packed f32 parameter slab

    b1, g1w, g1b, g1s = (prm[0:1, :H1], prm[1:2, :H1],
                         prm[2:3, :H1], prm[3:4, :H1])
    b2, g2w, g2b, g2s = (prm[4:5, :H2], prm[5:6, :H2],
                         prm[6:7, :H2], prm[7:8, :H2])
    w2 = prm[w2_row:w2_row + H1, :H2].astype(bf16)            # (H1, H2)
    wf = prm[wfb_row:wfb_row + H2, :OUT_PAD].astype(bf16)     # (H2, 128) lane-dense
    bf_row = prm[wfb_row + H2:wfb_row + H2 + 1, :OUT_PAD]     # (1, 128)  f32

    def graph_norm(h, weight, bias, mean_scale):
        # Per-graph mean / variance via the pre-scaled membership matrices.
        # Explicit precision: bf16 MXU operands, f32 accumulation.  Elementwise
        # center / variance / rsqrt / scale stays in f32 vregs (v5e-safe).
        mean_g = jnp.dot(am, h.astype(bf16), preferred_element_type=f32)      # (G, F)
        mean_n = jnp.dot(at, mean_g.astype(bf16), preferred_element_type=f32)  # (N, F)
        c = h - mean_scale * mean_n
        var_g = jnp.dot(am, (c * c).astype(bf16), preferred_element_type=f32)
        var_n = jnp.dot(at, var_g.astype(bf16), preferred_element_type=f32)
        return c * jax.lax.rsqrt(var_n + EPS) * weight + bias

    # ---- Layer 1: GCNConv.  (x @ w1) hoisted to the wrapper as h0 (bf16);
    #      the kernel runs a single adj matmul on the serial chain.
    h = jnp.dot(adj, h0_ref[...], preferred_element_type=f32) + b1
    h = jnp.maximum(graph_norm(h, g1w, g1b, g1s), 0.0)

    # ---- Layer 2: GCNConv, inner dot first (H2 <= H1): adj @ (h @ w2) + b2
    hw = jnp.dot(h.astype(bf16), w2, preferred_element_type=f32)
    h = jnp.dot(adj, hw.astype(bf16), preferred_element_type=f32) + b2
    h = jnp.maximum(graph_norm(h, g2w, g2b, g2s), 0.0)

    # ---- Final Linear, lane-dense padded output (unmasked vst).
    out_ref[...] = (jnp.dot(h.astype(bf16), wf, preferred_element_type=f32)
                    + bf_row)


def decoder_pallas(adj_norm, assign, inv_counts, x, params):
    N = x.shape[0]
    G = assign.shape[0]
    H1 = params["w1"].shape[1]
    H2 = params["w2"].shape[1]
    OUT = params["wf"].shape[1]

    f32 = jnp.float32
    bf16 = jnp.bfloat16

    # Hoisted graph-structure prep (no in-kernel transposes / invc multiplies).
    assign_mean = (assign * inv_counts).astype(f32)   # (G, N)
    assign_t = assign.T.astype(f32)                   # (N, G)

    # Layer-1 input projection hoisted out of the kernel (tiny matmul).
    h0 = (x.astype(f32) @ params["w1"].astype(f32)).astype(bf16)   # (N, H1)

    # Wrapper-side bf16 cast of the dominant operand: halves DMA bytes and
    # avoids a second in-VMEM copy.
    adj_bf16 = adj_norm.astype(bf16)

    # Single lane-dense parameter slab: rows 0-7 = per-layer vectors,
    # then w2, then [wf ; bf] zero-padded to 128 lanes.  One DMA for all params.
    PW = _round_up(max(H1, H2, OUT_PAD), 128)
    w2_row = 8
    wfb_row = w2_row + _round_up(H1, 8)
    n_rows = _round_up(wfb_row + H2 + 1, 8)
    prm = jnp.zeros((n_rows, PW), f32)
    prm = prm.at[0, :H1].set(params["b1"].reshape(-1))
    prm = prm.at[1, :H1].set(params["g1w"].reshape(-1))
    prm = prm.at[2, :H1].set(params["g1b"].reshape(-1))
    prm = prm.at[3, :H1].set(params["g1s"].reshape(-1))
    prm = prm.at[4, :H2].set(params["b2"].reshape(-1))
    prm = prm.at[5, :H2].set(params["g2w"].reshape(-1))
    prm = prm.at[6, :H2].set(params["g2b"].reshape(-1))
    prm = prm.at[7, :H2].set(params["g2s"].reshape(-1))
    prm = prm.at[w2_row:w2_row + H1, :H2].set(params["w2"])
    prm = prm.at[wfb_row:wfb_row + H2, :OUT].set(params["wf"])
    prm = prm.at[wfb_row + H2, :OUT].set(params["bf"].reshape(-1))

    args = (adj_bf16, assign_mean, assign_t, h0, prm)

    # Cost / VMEM accounting from the real footprint.
    in_bytes = sum(int(a.size) * a.dtype.itemsize for a in args)
    out_bytes = N * OUT_PAD * 4
    flops = int(2 * N * N * H1 + 8 * G * N * H1
                + 2 * N * H1 * H2 + 2 * N * N * H2 + 8 * G * N * H2
                + 2 * N * H2 * OUT_PAD)
    cost = pl.CostEstimate(flops=flops,
                           transcendentals=int(N * (H1 + H2)),
                           bytes_accessed=int(in_bytes + out_bytes))
    # Default scoped VMEM (16/32 MiB) is hit long before physical as N grows;
    # size from footprint with headroom for f32 intermediates, cap at 64 MiB (v7x).
    vmem_limit = int(min(64 * 2**20,
                         max(8 * 2**20, 4 * (in_bytes + out_bytes))))

    out_pad = pl.pallas_call(
        functools.partial(decoder_kernel, H1=H1, H2=H2,
                          w2_row=w2_row, wfb_row=wfb_row),
        out_shape=jax.ShapeDtypeStruct((N, OUT_PAD), f32),
        in_specs=[pl.BlockSpec(memory_space=pltpu.MemorySpace.VMEM)] * len(args),
        out_specs=pl.BlockSpec(memory_space=pltpu.MemorySpace.VMEM),
        compiler_params=pltpu.CompilerParams(vmem_limit_bytes=vmem_limit),
        cost_estimate=cost,
    )(*args)
    return out_pad[:, :OUT]


# ---------------------------------------------------------------------------
# Pure-JAX references for correctness checking.
# ---------------------------------------------------------------------------
def decoder_ref(adj_norm, assign, inv_counts, x, p):
    """Full-f32 reference (the module's math)."""
    def gcn(h, w, b):
        return adj_norm @ (h @ w) + b

    def gn(h, w, b, s):
        mean_n = assign.T @ ((assign @ h) * inv_counts)
        c = h - s * mean_n
        var_n = assign.T @ ((assign @ (c * c)) * inv_counts)
        return c * jax.lax.rsqrt(var_n + EPS) * w + b

    h = jnp.maximum(gn(gcn(x, p["w1"], p["b1"]), p["g1w"], p["g1b"], p["g1s"]), 0.0)
    h = jnp.maximum(gn(gcn(h, p["w2"], p["b2"]), p["g2w"], p["g2b"], p["g2s"]), 0.0)
    return h @ p["wf"] + p["bf"]


def decoder_ref_bf16(adj_norm, assign, inv_counts, x, p):
    """Reference emulating the kernel's exact bf16-operand / f32-accumulate dots."""
    bf16 = jnp.bfloat16
    f32 = jnp.float32

    def bdot(a, b):
        return jnp.dot(a.astype(bf16), b.astype(bf16), preferred_element_type=f32)

    am = (assign * inv_counts).astype(f32)
    at = assign.T.astype(f32)

    def gn(h, w, b, s):
        mean_g = bdot(am, h)
        mean_n = bdot(at, mean_g)
        c = h - s * mean_n
        var_g = bdot(am, c * c)
        var_n = bdot(at, var_g)
        return c * jax.lax.rsqrt(var_n + EPS) * w + b

    h0 = (x.astype(f32) @ p["w1"].astype(f32)).astype(bf16)       # hoisted proj
    h = bdot(adj_norm, h0) + p["b1"]
    h = jnp.maximum(gn(h, p["g1w"], p["g1b"], p["g1s"]), 0.0)
    hw = bdot(h, p["w2"])
    h = bdot(adj_norm, hw) + p["b2"]
    h = jnp.maximum(gn(h, p["g2w"], p["g2b"], p["g2s"]), 0.0)
    return bdot(h, p["wf"]) + p["bf"]


if __name__ == "__main__":
    # Small shapes: 2 graphs x 16 nodes, p_e=8, v_h1_s=32, v_h2_s=16
    N, G = 32, 2
    P_E, H1, H2 = 8, 32, 16

    key = jax.random.PRNGKey(0)
    k_x, k1, k2, k3 = jax.random.split(key, 4)

    x = jax.random.normal(k_x, (N, P_E), dtype=jnp.float32)

    # Graph structure: two disjoint 16-node rings (both edge directions).
    nodes_per_graph = N // G
    src_list, dst_list = [], []
    for g in range(G):
        base = g * nodes_per_graph
        for i in range(nodes_per_graph):
            a = base + i
            b = base + (i + 1) % nodes_per_graph
            src_list += [a, b]
            dst_list += [b, a]
    src = jnp.array(src_list, dtype=jnp.int32)
    dst = jnp.array(dst_list, dtype=jnp.int32)
    batch = jnp.repeat(jnp.arange(G, dtype=jnp.int32), nodes_per_graph)

    # Dense symmetric-normalized adjacency with self loops (GCN normalization).
    A = jnp.zeros((N, N), jnp.float32).at[dst, src].set(1.0)
    A = A + jnp.eye(N, dtype=jnp.float32)
    deg = A.sum(axis=1)
    dinv = 1.0 / jnp.sqrt(deg)
    adj_norm = dinv[:, None] * A * dinv[None, :]

    # One-hot membership + inverse counts for GraphNorm per-graph means.
    assign = (batch[None, :] == jnp.arange(G, dtype=jnp.int32)[:, None]).astype(jnp.float32)
    inv_counts = 1.0 / assign.sum(axis=1, keepdims=True)

    params = {
        "w1": 0.2 * jax.random.normal(k1, (P_E, H1), dtype=jnp.float32),
        "b1": jnp.zeros((1, H1), jnp.float32),
        "g1w": jnp.ones((1, H1), jnp.float32),     # GraphNorm weight
        "g1b": jnp.zeros((1, H1), jnp.float32),    # GraphNorm bias
        "g1s": jnp.ones((1, H1), jnp.float32),     # GraphNorm mean_scale
        "w2": 0.2 * jax.random.normal(k2, (H1, H2), dtype=jnp.float32),
        "b2": jnp.zeros((1, H2), jnp.float32),
        "g2w": jnp.ones((1, H2), jnp.float32),
        "g2b": jnp.zeros((1, H2), jnp.float32),
        "g2s": jnp.ones((1, H2), jnp.float32),
        "wf": 0.2 * jax.random.normal(k3, (H2, 2), dtype=jnp.float32),
        "bf": jnp.zeros((1, 2), jnp.float32),
    }

    out = decoder_pallas(adj_norm, assign, inv_counts, x, params)
    out = jax.block_until_ready(out)
    assert out.shape == (N, 2)

    # Tight check vs. a reference that emulates the kernel's bf16-operand matmuls.
    ref_bf16 = decoder_ref_bf16(adj_norm, assign, inv_counts, x, params)
    assert jnp.allclose(out, ref_bf16, atol=5e-3, rtol=5e-3), \
        "Pallas output mismatch vs bf16-emulating reference"

    # Loose check vs. the pure-f32 module math (bf16 MXU operands lose ~<1% rel).
    ref_f32 = decoder_ref(adj_norm, assign, inv_counts, x, params)
    assert jnp.allclose(out, ref_f32, atol=5e-2, rtol=5e-2), \
        "Pallas output drifted too far from f32 reference"

    print("KERNEL_OK")
</pallas_src>

<mosaic_0001>
module attributes {stable_mosaic.version = 11 : i64} {
  func.func @decoder_kernel(%arg0: memref<32x32xbf16, #tpu.memory_space<vmem>>, %arg1: memref<2x32xf32, #tpu.memory_space<vmem>>, %arg2: memref<32x2xf32, #tpu.memory_space<vmem>>, %arg3: memref<32x32xbf16, #tpu.memory_space<vmem>>, %arg4: memref<64x128xf32, #tpu.memory_space<vmem>>, %arg5: memref<32x128xf32, #tpu.memory_space<vmem>>) attributes {dimension_semantics = [], scalar_prefetch = 0 : i64, scratch_operands = 0 : i64, tpu.core_type = #tpu.core_type<tc>} {
    %c0 = arith.constant 0 : index
    %c0_0 = arith.constant 0 : index
    %0 = vector.load %arg0[%c0, %c0_0] : memref<32x32xbf16, #tpu.memory_space<vmem>>, vector<32x32xbf16>
    %c0_1 = arith.constant 0 : index
    %c0_2 = arith.constant 0 : index
    %1 = vector.load %arg1[%c0_1, %c0_2] : memref<2x32xf32, #tpu.memory_space<vmem>>, vector<2x32xf32>
    %2 = arith.truncf %1 : vector<2x32xf32> to vector<2x32xbf16>
    %c0_3 = arith.constant 0 : index
    %c0_4 = arith.constant 0 : index
    %3 = vector.load %arg2[%c0_3, %c0_4] : memref<32x2xf32, #tpu.memory_space<vmem>>, vector<32x2xf32>
    %4 = arith.truncf %3 : vector<32x2xf32> to vector<32x2xbf16>
    %c0_5 = arith.constant 0 : index
    %c0_6 = arith.constant 0 : index
    %5 = vector.load %arg4[%c0_5, %c0_6] : memref<64x128xf32, #tpu.memory_space<vmem>>, vector<64x128xf32>
    %6 = vector.extract_strided_slice %5 {offsets = [0, 0], sizes = [1, 32], strides = [1, 1]} : vector<64x128xf32> to vector<1x32xf32>
    %7 = vector.extract_strided_slice %5 {offsets = [1, 0], sizes = [1, 32], strides = [1, 1]} : vector<64x128xf32> to vector<1x32xf32>
    %8 = vector.extract_strided_slice %5 {offsets = [2, 0], sizes = [1, 32], strides = [1, 1]} : vector<64x128xf32> to vector<1x32xf32>
    %9 = vector.extract_strided_slice %5 {offsets = [3, 0], sizes = [1, 32], strides = [1, 1]} : vector<64x128xf32> to vector<1x32xf32>
    %10 = vector.extract_strided_slice %5 {offsets = [4, 0], sizes = [1, 16], strides = [1, 1]} : vector<64x128xf32> to vector<1x16xf32>
    %11 = vector.extract_strided_slice %5 {offsets = [5, 0], sizes = [1, 16], strides = [1, 1]} : vector<64x128xf32> to vector<1x16xf32>
    %12 = vector.extract_strided_slice %5 {offsets = [6, 0], sizes = [1, 16], strides = [1, 1]} : vector<64x128xf32> to vector<1x16xf32>
    %13 = vector.extract_strided_slice %5 {offsets = [7, 0], sizes = [1, 16], strides = [1, 1]} : vector<64x128xf32> to vector<1x16xf32>
    %14 = vector.extract_strided_slice %5 {offsets = [8, 0], sizes = [32, 16], strides = [1, 1]} : vector<64x128xf32> to vector<32x16xf32>
    %15 = arith.truncf %14 : vector<32x16xf32> to vector<32x16xbf16>
    %16 = vector.extract_strided_slice %5 {offsets = [40, 0], sizes = [16, 128], strides = [1, 1]} : vector<64x128xf32> to vector<16x128xf32>
    %17 = arith.truncf %16 : vector<16x128xf32> to vector<16x128xbf16>
    %18 = vector.extract_strided_slice %5 {offsets = [56, 0], sizes = [1, 128], strides = [1, 1]} : vector<64x128xf32> to vector<1x128xf32>
    %c0_7 = arith.constant 0 : index
    %c0_8 = arith.constant 0 : index
    %19 = vector.load %arg3[%c0_7, %c0_8] : memref<32x32xbf16, #tpu.memory_space<vmem>>, vector<32x32xbf16>
    %cst = arith.constant dense<0.000000e+00> : vector<32x32xf32>
    %20 = tpu.matmul %0, %19, %cst {dimension_numbers = #tpu.dot_dimension_numbers<[1], [0], [0], [1], [0, 0, 1, 1], [], []>} : vector<32x32xbf16>, vector<32x32xbf16>, vector<32x32xf32> -> vector<32x32xf32>
    %21 = vector.broadcast %6 : vector<1x32xf32> to vector<32x32xf32>
    %22 = arith.addf %20, %21 : vector<32x32xf32>
    %23 = arith.truncf %22 : vector<32x32xf32> to vector<32x32xbf16>
    %cst_9 = arith.constant dense<0.000000e+00> : vector<2x32xf32>
    %24 = tpu.matmul %2, %23, %cst_9 {dimension_numbers = #tpu.dot_dimension_numbers<[1], [0], [0], [1], [0, 0, 1, 1], [], []>} : vector<2x32xbf16>, vector<32x32xbf16>, vector<2x32xf32> -> vector<2x32xf32>
    %25 = arith.truncf %24 : vector<2x32xf32> to vector<2x32xbf16>
    %cst_10 = arith.constant dense<0.000000e+00> : vector<32x32xf32>
    %26 = tpu.matmul %4, %25, %cst_10 {dimension_numbers = #tpu.dot_dimension_numbers<[1], [0], [0], [1], [0, 0, 1, 1], [], []>} : vector<32x2xbf16>, vector<2x32xbf16>, vector<32x32xf32> -> vector<32x32xf32>
    %27 = vector.broadcast %9 : vector<1x32xf32> to vector<32x32xf32>
    %28 = arith.mulf %27, %26 : vector<32x32xf32>
    %29 = arith.subf %22, %28 : vector<32x32xf32>
    %30 = arith.mulf %29, %29 : vector<32x32xf32>
    %31 = arith.truncf %30 : vector<32x32xf32> to vector<32x32xbf16>
    %cst_11 = arith.constant dense<0.000000e+00> : vector<2x32xf32>
    %32 = tpu.matmul %2, %31, %cst_11 {dimension_numbers = #tpu.dot_dimension_numbers<[1], [0], [0], [1], [0, 0, 1, 1], [], []>} : vector<2x32xbf16>, vector<32x32xbf16>, vector<2x32xf32> -> vector<2x32xf32>
    %33 = arith.truncf %32 : vector<2x32xf32> to vector<2x32xbf16>
    %cst_12 = arith.constant dense<0.000000e+00> : vector<32x32xf32>
    %34 = tpu.matmul %4, %33, %cst_12 {dimension_numbers = #tpu.dot_dimension_numbers<[1], [0], [0], [1], [0, 0, 1, 1], [], []>} : vector<32x2xbf16>, vector<2x32xbf16>, vector<32x32xf32> -> vector<32x32xf32>
    %cst_13 = arith.constant 9.99999974E-6 : f32
    %35 = vector.broadcast %cst_13 : f32 to vector<32x32xf32>
    %36 = arith.addf %34, %35 : vector<32x32xf32>
    %37 = math.rsqrt %36 : vector<32x32xf32>
    %38 = arith.mulf %29, %37 : vector<32x32xf32>
    %39 = vector.broadcast %7 : vector<1x32xf32> to vector<32x32xf32>
    %40 = arith.mulf %38, %39 : vector<32x32xf32>
    %41 = vector.broadcast %8 : vector<1x32xf32> to vector<32x32xf32>
    %42 = arith.addf %40, %41 : vector<32x32xf32>
    %cst_14 = arith.constant 0.000000e+00 : f32
    %43 = vector.broadcast %cst_14 : f32 to vector<32x32xf32>
    %44 = arith.maximumf %42, %43 : vector<32x32xf32>
    %45 = arith.truncf %44 : vector<32x32xf32> to vector<32x32xbf16>
    %cst_15 = arith.constant dense<0.000000e+00> : vector<32x16xf32>
    %46 = tpu.matmul %45, %15, %cst_15 {dimension_numbers = #tpu.dot_dimension_numbers<[1], [0], [0], [1], [0, 0, 1, 1], [], []>} : vector<32x32xbf16>, vector<32x16xbf16>, vector<32x16xf32> -> vector<32x16xf32>
    %47 = arith.truncf %46 : vector<32x16xf32> to vector<32x16xbf16>
    %cst_16 = arith.constant dense<0.000000e+00> : vector<32x16xf32>
    %48 = tpu.matmul %0, %47, %cst_16 {dimension_numbers = #tpu.dot_dimension_numbers<[1], [0], [0], [1], [0, 0, 1, 1], [], []>} : vector<32x32xbf16>, vector<32x16xbf16>, vector<32x16xf32> -> vector<32x16xf32>
    %49 = vector.broadcast %10 : vector<1x16xf32> to vector<32x16xf32>
    %50 = arith.addf %48, %49 : vector<32x16xf32>
    %51 = arith.truncf %50 : vector<32x16xf32> to vector<32x16xbf16>
    %cst_17 = arith.constant dense<0.000000e+00> : vector<2x16xf32>
    %52 = tpu.matmul %2, %51, %cst_17 {dimension_numbers = #tpu.dot_dimension_numbers<[1], [0], [0], [1], [0, 0, 1, 1], [], []>} : vector<2x32xbf16>, vector<32x16xbf16>, vector<2x16xf32> -> vector<2x16xf32>
    %53 = arith.truncf %52 : vector<2x16xf32> to vector<2x16xbf16>
    %cst_18 = arith.constant dense<0.000000e+00> : vector<32x16xf32>
    %54 = tpu.matmul %4, %53, %cst_18 {dimension_numbers = #tpu.dot_dimension_numbers<[1], [0], [0], [1], [0, 0, 1, 1], [], []>} : vector<32x2xbf16>, vector<2x16xbf16>, vector<32x16xf32> -> vector<32x16xf32>
    %55 = vector.broadcast %13 : vector<1x16xf32> to vector<32x16xf32>
    %56 = arith.mulf %55, %54 : vector<32x16xf32>
    %57 = arith.subf %50, %56 : vector<32x16xf32>
    %58 = arith.mulf %57, %57 : vector<32x16xf32>
    %59 = arith.truncf %58 : vector<32x16xf32> to vector<32x16xbf16>
    %cst_19 = arith.constant dense<0.000000e+00> : vector<2x16xf32>
    %60 = tpu.matmul %2, %59, %cst_19 {dimension_numbers = #tpu.dot_dimension_numbers<[1], [0], [0], [1], [0, 0, 1, 1], [], []>} : vector<2x32xbf16>, vector<32x16xbf16>, vector<2x16xf32> -> vector<2x16xf32>
    %61 = arith.truncf %60 : vector<2x16xf32> to vector<2x16xbf16>
    %cst_20 = arith.constant dense<0.000000e+00> : vector<32x16xf32>
    %62 = tpu.matmul %4, %61, %cst_20 {dimension_numbers = #tpu.dot_dimension_numbers<[1], [0], [0], [1], [0, 0, 1, 1], [], []>} : vector<32x2xbf16>, vector<2x16xbf16>, vector<32x16xf32> -> vector<32x16xf32>
    %cst_21 = arith.constant 9.99999974E-6 : f32
    %63 = vector.broadcast %cst_21 : f32 to vector<32x16xf32>
    %64 = arith.addf %62, %63 : vector<32x16xf32>
    %65 = math.rsqrt %64 : vector<32x16xf32>
    %66 = arith.mulf %57, %65 : vector<32x16xf32>
    %67 = vector.broadcast %11 : vector<1x16xf32> to vector<32x16xf32>
    %68 = arith.mulf %66, %67 : vector<32x16xf32>
    %69 = vector.broadcast %12 : vector<1x16xf32> to vector<32x16xf32>
    %70 = arith.addf %68, %69 : vector<32x16xf32>
    %cst_22 = arith.constant 0.000000e+00 : f32
    %71 = vector.broadcast %cst_22 : f32 to vector<32x16xf32>
    %72 = arith.maximumf %70, %71 : vector<32x16xf32>
    %73 = arith.truncf %72 : vector<32x16xf32> to vector<32x16xbf16>
    %cst_23 = arith.constant dense<0.000000e+00> : vector<32x128xf32>
    %74 = tpu.matmul %73, %17, %cst_23 {dimension_numbers = #tpu.dot_dimension_numbers<[1], [0], [0], [1], [0, 0, 1, 1], [], []>} : vector<32x16xbf16>, vector<16x128xbf16>, vector<32x128xf32> -> vector<32x128xf32>
    %75 = vector.broadcast %18 : vector<1x128xf32> to vector<32x128xf32>
    %76 = arith.addf %74, %75 : vector<32x128xf32>
    %c0_24 = arith.constant 0 : index
    %c0_25 = arith.constant 0 : index
    %77 = vector.load %arg5[%c0_24, %c0_25] : memref<32x128xf32, #tpu.memory_space<vmem>>, vector<32x128xf32>
    tpu.vector_store %arg5[%c0_24, %c0_25], %76 {strides = array<i32>} : memref<32x128xf32, #tpu.memory_space<vmem>>, vector<32x128xf32>,
    return
  }
}

</mosaic_0001>

<llo_original>
// kernel: tpu_custom_call.1
$region0: #{tpu_custom_call.1}
  #allocation0 [shape = 'u32[]', space=smem, size = 0x4, offset = 0x4, fixed_abs, tag = 'smem constant byte address 0x4 - core index']
  #allocation1 [shape = 'u32[144,128]{1,0:T(1,128)}', space=vmem, size = 0x12000, scoped, tag = 'internal scratch']
  %s0 = inlined_call_operand.vmem [shape: bf16[32,32], index: 0, kind: input, shape index: {}]
  %s1 = inlined_call_operand.vmem [shape: f32[2,32], index: 1, kind: input, shape index: {}]
  %s2 = inlined_call_operand.vmem [shape: f32[32,2], index: 2, kind: input, shape index: {}]
  %s3 = inlined_call_operand.vmem [shape: bf16[32,32], index: 3, kind: input, shape index: {}]
  %s4 = inlined_call_operand.hbm [shape: f32[64,128], index: 4, kind: input, shape index: {}]
  %s5 = inlined_call_operand.hbm [shape: f32[32,128], index: 5, kind: output, shape index: {}]
  %s6 = sld [smem:[#allocation0]]
  $region34: #{tpu_custom_call.1} parent=0
    _
  %s8 = ssub.s32 1, %s6
  %s9 = scalar_select 0, %s8, %s6
  $region1: #{tpu_custom_call.1} parent=0
    #allocation2 [shape = 'u8[32768]{0}', space=vmem, size = 0x8000, scoped, tag = 'input window, operand 4, single buffered']
    #allocation3 [shape = 's32[1]{0}', space=sflag, size = 0x4, scoped, tag = 'scoped memory for tpu_custom_call.1']
    #allocation4 [shape = 's32[1]{0}', space=sflag, size = 0x4, scoped, tag = 'scoped memory for tpu_custom_call.1']
    #allocation5 [shape = 'u8[16384]{0}', space=vmem, size = 0x4000, scoped, tag = 'output window, operand 0, single buffered']
    %10 = vsyncpa [#allocation3], 0
    %11 = vsyncpa [#allocation4], 0
    // Predicated region
    $region2: #{tpu_custom_call.1} parent=1 // pred_check
      _
    $region3: #{tpu_custom_call.1} parent=1 // pred_check_branch
      %13 = sbr.rel (0) target = $region5
    $region4: #{tpu_custom_call.1} parent=1 // pred_region
      _
    $region5: #{tpu_custom_call.1} parent=1 // pred_fallthru
      _
    // Predicated region
    $region6: #{tpu_custom_call.1} parent=1 // pred_check
      _
    $region7: #{tpu_custom_call.1} parent=1 // pred_check_branch
      %15 = sbr.rel (0) target = $region9
    $region8: #{tpu_custom_call.1} parent=1 // pred_region
      _
    $region9: #{tpu_custom_call.1} parent=1 // pred_fallthru
      _
    // Predicated region
    $region10: #{tpu_custom_call.1} parent=1 // pred_check
      _
    $region11: #{tpu_custom_call.1} parent=1 // pred_check_branch
      %17 = sbr.rel (0) target = $region13
    $region12: #{tpu_custom_call.1} parent=1 // pred_region
      _
    $region13: #{tpu_custom_call.1} parent=1 // pred_fallthru
      _
    // Predicated region
    $region14: #{tpu_custom_call.1} parent=1 // pred_check
      _
    $region15: #{tpu_custom_call.1} parent=1 // pred_check_branch
      %19 = sbr.rel (0) target = $region17
    $region16: #{tpu_custom_call.1} parent=1 // pred_region
      _
    $region17: #{tpu_custom_call.1} parent=1 // pred_fallthru
      _
    // Predicated region
    $region18: #{tpu_custom_call.1} parent=1 // pred_check
      _
    $region19: #{tpu_custom_call.1} parent=1 // pred_check_branch
      %21 = sbr.rel (0) target = $region21
    $region20: #{tpu_custom_call.1} parent=1 // pred_region
      %s23 = ssub.s32 1024, 1024
      %24 = vsyncadd [#allocation3], %s23
      %s25 = sshll.u32 [#allocation2], 4
      %s26 = int_to_ptr.vmem [resolvable:$true] %s25
      %31 = dma.hbm_to_vmem [thread:$0]  %s4, 1024, %s26, [#allocation3], 128, 128, 8
    $region21: #{tpu_custom_call.1} parent=1 // pred_fallthru
      _
    // Predicated region
    $region22: #{tpu_custom_call.1} parent=1 // pred_check
      _
    $region23: #{tpu_custom_call.1} parent=1 // pred_check_branch
      %33 = sbr.rel (0) target = $region25
    $region24: #{tpu_custom_call.1} parent=1 // pred_region
      %34 = dma.done [#allocation3], 1024
    $region25: #{tpu_custom_call.1} parent=1 // pred_fallthru
      _
    %v36 = vld [vmem:[%s0] sm:$0xf]
    %v37 = vld [vmem:[%s0 + $0x4] sm:$0xf]
    %v38 = vld [vmem:[%s0 + $0x8] sm:$0xf]
    %v39 = vld [vmem:[%s0 + $0xc] sm:$0xf]
    %v40 = vld [vmem:[%s1] sm:$0x3]
    %v41 = vpack.c.bf16 %v40, %v40
    %v42 = vld [vmem:[%s2] sm:$0xff]
    %v43 = vld [vmem:[%s2 + $0x8] sm:$0xff]
    %v44 = vld [vmem:[%s2 + $0x10] sm:$0xff]
    %v45 = vld [vmem:[%s2 + $0x18] sm:$0xff]
    %v46 = vpack.c.bf16 %v43, %v42
    %v47 = vpack.c.bf16 %v45, %v44
    %v48 = vld [vmem:[#allocation2] sm:$0xff]
    %v49 = vld [vmem:[#allocation2 + $0x8] sm:$0xff]
    %v50 = vld [vmem:[#allocation2 + $0x10] sm:$0xff]
    %v51 = vld [vmem:[#allocation2 + $0x18] sm:$0xff]
    %v52 = vld [vmem:[#allocation2 + $0x20] sm:$0xff]
    %v53 = vld [vmem:[#allocation2 + $0x28] sm:$0xff]
    %v54 = vld [vmem:[#allocation2 + $0x30] sm:$0xff]
    %v55 = vld [vmem:[#allocation2 + $0x38] sm:$0xff]
    %v56 = vpack.c.bf16 %v50, %v49
    %v57 = vpack.c.bf16 %v52, %v51
    %v58 = vpack.c.bf16 %v54, %v53
    %v59 = vld [vmem:[%s3] sm:$0xf]
    %v60 = vld [vmem:[%s3 + $0x4] sm:$0xf]
    %v61 = vld [vmem:[%s3 + $0x8] sm:$0xf]
    %v62 = vld [vmem:[%s3 + $0xc] sm:$0xf]
    %v63 = vlaneseq
    %v64 = vshrl.u32 %v63, 7
    %v65 = vsub.s32 0, %v64
    %v66 = vrot.slane %v48, %v65
    %v71 = vunpack.c.l.b16 %v36
    %v72 = vunpack.c.l.b16 %v37
    %v73 = vunpack.c.l.b16 %v38
    %v74 = vunpack.c.l.b16 %v39
    %v75 = vpack.c.b16 %v72, %v71
    %v76 = vpack.c.b16 %v74, %v73
    %v81 = vunpack.c.l.b16 %v59
    %v82 = vunpack.c.l.b16 %v60
    %v83 = vunpack.c.l.b16 %v61
    %v84 = vunpack.c.l.b16 %v62
    %v85 = vpack.c.b16 %v82, %v81
    %v86 = vpack.c.b16 %v84, %v83
    %vm89 = vcmask 261120
    %v91 = vsel %vm89, %v75, 0
    %v94 = vsel %vm89, %v76, 0
    %96 = vmatprep.subr.bf16.mxu0 0
    %97 = vmatpush1.bf16.msra.mxu0 %v85
    %98 = vmatprep.subr.bf16.mxu0 0
    %99 = vmatpush1.bf16.msra.mxu0 %v86
    %100 = vmatprep.subr.bf16.mxu0 0
    %101 = vmatpush1.bf16.msra.mxu0 0
    %102 = vmatprep.subr.bf16.mxu0 0
    %103 = vmatpush1.bf16.msra.mxu0 0
    %104 = vmatprep.subr.bf16.mxu0 0
    %105 = vmatpush1.bf16.msra.mxu0 0
    %106 = vmatprep.subr.bf16.mxu0 0
    %107 = vmatpush1.bf16.msra.mxu0 0
    %108 = vmatprep.subr.bf16.mxu0 0
    %109 = vmatpush1.bf16.msra.mxu0 0
    %110 = vmatprep.subr.bf16.mxu0 0
    %111 = vmatpush1.bf16.msra.mxu0 0
    %112 = vmatprep.subr.bf16.mxu0 0
    %113 = vmatpush1.bf16.msra.mxu0 0
    %114 = vmatprep.subr.bf16.mxu0 0
    %115 = vmatpush1.bf16.msra.mxu0 0
    %116 = vmatprep.subr.bf16.mxu0 0
    %117 = vmatpush1.bf16.msra.mxu0 0
    %118 = vmatprep.subr.bf16.mxu0 0
    %119 = vmatpush1.bf16.msra.mxu0 0
    %120 = vmatprep.subr.bf16.mxu0 0
    %121 = vmatpush1.bf16.msra.mxu0 0
    %122 = vmatprep.subr.bf16.mxu0 0
    %123 = vmatpush1.bf16.msra.mxu0 0
    %124 = vmatprep.subr.bf16.mxu0 0
    %125 = vmatpush1.bf16.msra.mxu0 0
    %126 = vmatprep.subr.bf16.mxu0 0
    %127 = vmatpush1.bf16.msra.mxu0 0
    %128 = vmatprep.mubr.bf16.mxu0 0
    %129 = vmatmul.mubr.bf16.gmra.mrb[0].mxu0 %v91
    %v130 = vpop.f32.mrb[0].mxu0
    %v131 = vadd.f32 %v66, %v130
    %v132 = vpop.f32.mrb[0].mxu0
    %v133 = vpop.f32.mrb[0].mxu0
    %v134 = vadd.f32 %v66, %v133
    %v135 = vpop.f32.mrb[0].mxu0
    %136 = vmatprep.mubr.bf16.mxu0 0
    %137 = vmatmul.mubr.bf16.gmra.mrb[0].mxu0 %v94
    %v138 = vpop.f32.mrb[0].mxu0
    %v139 = vadd.f32 %v66, %v138
    %v140 = vpop.f32.mrb[0].mxu0
    %v141 = vpop.f32.mrb[0].mxu0
    %v142 = vadd.f32 %v66, %v141
    %v143 = vpop.f32.mrb[0].mxu0
    %144 = vdwg.mxu0
    %v145 = vpack.c.bf16 %v134, %v131
    %v146 = vpack.c.bf16 %v142, %v139
    %v148 = vsel %vm89, %v41, 0
    %150 = vmatprep.subr.bf16.mxu0 0
    %151 = vmatpush1.bf16.msra.mxu0 %v145
    %152 = vmatprep.subr.bf16.mxu0 0
    %153 = vmatpush1.bf16.msra.mxu0 %v146
    %154 = vmatprep.subr.bf16.mxu0 0
    %155 = vmatpush1.bf16.msra.mxu0 0
    %156 = vmatprep.subr.bf16.mxu0 0
    %157 = vmatpush1.bf16.msra.mxu0 0
    %158 = vmatprep.subr.bf16.mxu0 0
    %159 = vmatpush1.bf16.msra.mxu0 0
    %160 = vmatprep.subr.bf16.mxu0 0
    %161 = vmatpush1.bf16.msra.mxu0 0
    %162 = vmatprep.subr.bf16.mxu0 0
    %163 = vmatpush1.bf16.msra.mxu0 0
    %164 = vmatprep.subr.bf16.mxu0 0
    %165 = vmatpush1.bf16.msra.mxu0 0
    %166 = vmatprep.subr.bf16.mxu0 0
    %167 = vmatpush1.bf16.msra.mxu0 0
    %168 = vmatprep.subr.bf16.mxu0 0
    %169 = vmatpush1.bf16.msra.mxu0 0
    %170 = vmatprep.subr.bf16.mxu0 0
    %171 = vmatpush1.bf16.msra.mxu0 0
    %172 = vmatprep.subr.bf16.mxu0 0
    %173 = vmatpush1.bf16.msra.mxu0 0
    %174 = vmatprep.subr.bf16.mxu0 0
    %175 = vmatpush1.bf16.msra.mxu0 0
    %176 = vmatprep.subr.bf16.mxu0 0
    %177 = vmatpush1.bf16.msra.mxu0 0
    %178 = vmatprep.subr.bf16.mxu0 0
    %179 = vmatpush1.bf16.msra.mxu0 0
    %180 = vmatprep.subr.bf16.mxu0 0
    %181 = vmatpush1.bf16.msra.mxu0 0
    %182 = vmatprep.mubr.bf16.mxu0 0
    %183 = vmatmul.mubr.bf16.gmra.mrb[0].mxu0 %v148
    %v184 = vpop.f32.mrb[0].mxu0
    %v185 = vadd.f32 0.0, %v184
    %v186 = vpop.f32.mrb[0].mxu0
    %v187 = vpop.f32.mrb[0].mxu0
    %v188 = vpop.f32.mrb[0].mxu0
    %189 = vdwg.mxu0
    %v190 = vpack.c.bf16 %v185, %v185
    %vm191 = vcmask 15360
    %v193 = vsel %vm191, %v46, 0
    %v196 = vsel %vm191, %v47, 0
    %vm198 = vcmask 1040384
    %v200 = vsel %vm198, %v190, 0
    %202 = vmatprep.subr.bf16.mxu0 0
    %203 = vmatpush1.bf16.msra.mxu0 %v200
    %204 = vmatprep.subr.bf16.mxu0 0
    %205 = vmatpush1.bf16.msra.mxu0 0
    %206 = vmatprep.subr.bf16.mxu0 0
    %207 = vmatpush1.bf16.msra.mxu0 0
    %208 = vmatprep.subr.bf16.mxu0 0
    %209 = vmatpush1.bf16.msra.mxu0 0
    %210 = vmatprep.subr.bf16.mxu0 0
    %211 = vmatpush1.bf16.msra.mxu0 0
    %212 = vmatprep.subr.bf16.mxu0 0
    %213 = vmatpush1.bf16.msra.mxu0 0
    %214 = vmatprep.subr.bf16.mxu0 0
    %215 = vmatpush1.bf16.msra.mxu0 0
    %216 = vmatprep.subr.bf16.mxu0 0
    %217 = vmatpush1.bf16.msra.mxu0 0
    %218 = vmatprep.subr.bf16.mxu0 0
    %219 = vmatpush1.bf16.msra.mxu0 0
    %220 = vmatprep.subr.bf16.mxu0 0
    %221 = vmatpush1.bf16.msra.mxu0 0
    %222 = vmatprep.subr.bf16.mxu0 0
    %223 = vmatpush1.bf16.msra.mxu0 0
    %224 = vmatprep.subr.bf16.mxu0 0
    %225 = vmatpush1.bf16.msra.mxu0 0
    %226 = vmatprep.subr.bf16.mxu0 0
    %227 = vmatpush1.bf16.msra.mxu0 0
    %228 = vmatprep.subr.bf16.mxu0 0
    %229 = vmatpush1.bf16.msra.mxu0 0
    %230 = vmatprep.subr.bf16.mxu0 0
    %231 = vmatpush1.bf16.msra.mxu0 0
    %232 = vmatprep.subr.bf16.mxu0 0
    %233 = vmatpush1.bf16.msra.mxu0 0
    %234 = vmatprep.mubr.bf16.mxu0 0
    %235 = vmatmul.mubr.bf16.gmra.mrb[0].mxu0 %v193
    %v236 = vpop.f32.mrb[0].mxu0
    %v237 = vadd.f32 0.0, %v236
    %v238 = vpop.f32.mrb[0].mxu0
    %v239 = vpop.f32.mrb[0].mxu0
    %v240 = vadd.f32 0.0, %v239
    %v241 = vpop.f32.mrb[0].mxu0
    %242 = vmatprep.mubr.bf16.mxu0 0
    %243 = vmatmul.mubr.bf16.gmra.mrb[0].mxu0 %v196
    %v244 = vpop.f32.mrb[0].mxu0
    %v245 = vadd.f32 0.0, %v244
    %v246 = vpop.f32.mrb[0].mxu0
    %v247 = vpop.f32.mrb[0].mxu0
    %v248 = vadd.f32 0.0, %v247
    %v249 = vpop.f32.mrb[0].mxu0
    %250 = vdwg.mxu0
    %v251 = vlaneseq
    %v252 = vshrl.u32 %v251, 7
    %v253 = vsub.s32 3, %v252
    %v254 = vrot.slane %v48, %v253
    %v255 = vmul.f32 %v254, %v237
    %v256 = vmul.f32 %v254, %v240
    %v257 = vmul.f32 %v254, %v245
    %v258 = vmul.f32 %v254, %v248
    %v259 = vsub.f32 %v131, %v255
    %v260 = vsub.f32 %v134, %v256
    %v261 = vsub.f32 %v139, %v257
    %v262 = vsub.f32 %v142, %v258
    %v263 = vmul.f32 %v259, %v259
    %v264 = vmul.f32 %v260, %v260
    %v265 = vmul.f32 %v261, %v261
    %v266 = vmul.f32 %v262, %v262
    %v267 = vpack.c.bf16 %v264, %v263
    %v268 = vpack.c.bf16 %v266, %v265
    %269 = vmatprep.subr.bf16.mxu0 0
    %270 = vmatpush1.bf16.msra.mxu0 %v267
    %271 = vmatprep.subr.bf16.mxu0 0
    %272 = vmatpush1.bf16.msra.mxu0 %v268
    %273 = vmatprep.subr.bf16.mxu0 0
    %274 = vmatpush1.bf16.msra.mxu0 0
    %275 = vmatprep.subr.bf16.mxu0 0
    %276 = vmatpush1.bf16.msra.mxu0 0
    %277 = vmatprep.subr.bf16.mxu0 0
    %278 = vmatpush1.bf16.msra.mxu0 0
    %279 = vmatprep.subr.bf16.mxu0 0
    %280 = vmatpush1.bf16.msra.mxu0 0
    %281 = vmatprep.subr.bf16.mxu0 0
    %282 = vmatpush1.bf16.msra.mxu0 0
    %283 = vmatprep.subr.bf16.mxu0 0
    %284 = vmatpush1.bf16.msra.mxu0 0
    %285 = vmatprep.subr.bf16.mxu0 0
    %286 = vmatpush1.bf16.msra.mxu0 0
    %287 = vmatprep.subr.bf16.mxu0 0
    %288 = vmatpush1.bf16.msra.mxu0 0
    %289 = vmatprep.subr.bf16.mxu0 0
    %290 = vmatpush1.bf16.msra.mxu0 0
    %291 = vmatprep.subr.bf16.mxu0 0
    %292 = vmatpush1.bf16.msra.mxu0 0
    %293 = vmatprep.subr.bf16.mxu0 0
    %294 = vmatpush1.bf16.msra.mxu0 0
    %295 = vmatprep.subr.bf16.mxu0 0
    %296 = vmatpush1.bf16.msra.mxu0 0
    %297 = vmatprep.subr.bf16.mxu0 0
    %298 = vmatpush1.bf16.msra.mxu0 0
    %299 = vmatprep.subr.bf16.mxu0 0
    %300 = vmatpush1.bf16.msra.mxu0 0
    %301 = vmatprep.mubr.bf16.mxu0 0
    %302 = vmatmul.mubr.bf16.gmra.mrb[0].mxu0 %v148
    %v303 = vpop.f32.mrb[0].mxu0
    %v304 = vadd.f32 0.0, %v303
    %v305 = vpop.f32.mrb[0].mxu0
    %v306 = vpop.f32.mrb[0].mxu0
    %v307 = vpop.f32.mrb[0].mxu0
    %308 = vdwg.mxu0
    %v309 = vpack.c.bf16 %v304, %v304
    %v311 = vsel %vm198, %v309, 0
    %313 = vmatprep.subr.bf16.mxu0 0
    %314 = vmatpush1.bf16.msra.mxu0 %v311
    %315 = vmatprep.subr.bf16.mxu0 0
    %316 = vmatpush1.bf16.msra.mxu0 0
    %317 = vmatprep.subr.bf16.mxu0 0
    %318 = vmatpush1.bf16.msra.mxu0 0
    %319 = vmatprep.subr.bf16.mxu0 0
    %320 = vmatpush1.bf16.msra.mxu0 0
    %321 = vmatprep.subr.bf16.mxu0 0
    %322 = vmatpush1.bf16.msra.mxu0 0
    %323 = vmatprep.subr.bf16.mxu0 0
    %324 = vmatpush1.bf16.msra.mxu0 0
    %325 = vmatprep.subr.bf16.mxu0 0
    %326 = vmatpush1.bf16.msra.mxu0 0
    %327 = vmatprep.subr.bf16.mxu0 0
    %328 = vmatpush1.bf16.msra.mxu0 0
    %329 = vmatprep.subr.bf16.mxu0 0
    %330 = vmatpush1.bf16.msra.mxu0 0
    %331 = vmatprep.subr.bf16.mxu0 0
    %332 = vmatpush1.bf16.msra.mxu0 0
    %333 = vmatprep.subr.bf16.mxu0 0
    %334 = vmatpush1.bf16.msra.mxu0 0
    %335 = vmatprep.subr.bf16.mxu0 0
    %336 = vmatpush1.bf16.msra.mxu0 0
    %337 = vmatprep.subr.bf16.mxu0 0
    %338 = vmatpush1.bf16.msra.mxu0 0
    %339 = vmatprep.subr.bf16.mxu0 0
    %340 = vmatpush1.bf16.msra.mxu0 0
    %341 = vmatprep.subr.bf16.mxu0 0
    %342 = vmatpush1.bf16.msra.mxu0 0
    %343 = vmatprep.subr.bf16.mxu0 0
    %344 = vmatpush1.bf16.msra.mxu0 0
    %345 = vmatprep.mubr.bf16.mxu0 0
    %346 = vmatmul.mubr.bf16.gmra.mrb[0].mxu0 %v193
    %v347 = vpop.f32.mrb[0].mxu0
    %v348 = vadd.f32 1e-05, %v347
    %v349 = vpop.f32.mrb[0].mxu0
    %v350 = vpop.f32.mrb[0].mxu0
    %v351 = vadd.f32 1e-05, %v350
    %v352 = vpop.f32.mrb[0].mxu0
    %353 = vmatprep.mubr.bf16.mxu0 0
    %354 = vmatmul.mubr.bf16.gmra.mrb[0].mxu0 %v196
    %v355 = vpop.f32.mrb[0].mxu0
    %v356 = vadd.f32 1e-05, %v355
    %v357 = vpop.f32.mrb[0].mxu0
    %v358 = vpop.f32.mrb[0].mxu0
    %v359 = vadd.f32 1e-05, %v358
    %v360 = vpop.f32.mrb[0].mxu0
    %361 = vdwg.mxu0
    %v362 = vrsqrt.pop %v348
    %v363 = vrsqrt.pop %v351
    %v364 = vrsqrt.pop %v356
    %v365 = vrsqrt.pop %v359
    %v366 = vmul.f32 %v259, %v362
    %v367 = vmul.f32 %v260, %v363
    %v368 = vmul.f32 %v261, %v364
    %v369 = vmul.f32 %v262, %v365
    %v370 = vlaneseq
    %v371 = vshrl.u32 %v370, 7
    %v372 = vsub.s32 1, %v371
    %v373 = vrot.slane %v48, %v372
    %v374 = vmul.f32 %v366, %v373
    %v375 = vmul.f32 %v367, %v373
    %v376 = vmul.f32 %v368, %v373
    %v377 = vmul.f32 %v369, %v373
    %v378 = vlaneseq
    %v379 = vshrl.u32 %v378, 7
    %v380 = vsub.s32 2, %v379
    %v381 = vrot.slane %v48, %v380
    %v382 = vadd.f32 %v374, %v381
    %v383 = vadd.f32 %v375, %v381
    %v384 = vadd.f32 %v376, %v381
    %v385 = vadd.f32 %v377, %v381
    %v386 = vmax.f32 %v382, 0.0
    %v387 = vmax.f32 %v383, 0.0
    %v388 = vmax.f32 %v384, 0.0
    %v389 = vmax.f32 %v385, 0.0
    %v390 = vpack.c.bf16 %v387, %v386
    %v391 = vpack.c.bf16 %v389, %v388
    %v393 = vsel %vm89, %v390, 0
    %v396 = vsel %vm89, %v391, 0
    %398 = vmatprep.subr.bf16.mxu0 0
    %399 = vmatpush1.bf16.msra.mxu0 %v56
    %400 = vmatprep.subr.bf16.mxu0 0
    %401 = vmatpush1.bf16.msra.mxu0 %v57
    %402 = vmatprep.subr.bf16.mxu0 0
    %403 = vmatpush1.bf16.msra.mxu0 0
    %404 = vmatprep.subr.bf16.mxu0 0
    %405 = vmatpush1.bf16.msra.mxu0 0
    %406 = vmatprep.subr.bf16.mxu0 0
    %407 = vmatpush1.bf16.msra.mxu0 0
    %408 = vmatprep.subr.bf16.mxu0 0
    %409 = vmatpush1.bf16.msra.mxu0 0
    %410 = vmatprep.subr.bf16.mxu0 0
    %411 = vmatpush1.bf16.msra.mxu0 0
    %412 = vmatprep.subr.bf16.mxu0 0
    %413 = vmatpush1.bf16.msra.mxu0 0
    %414 = vmatprep.subr.bf16.mxu0 0
    %415 = vmatpush1.bf16.msra.mxu0 0
    %416 = vmatprep.subr.bf16.mxu0 0
    %417 = vmatpush1.bf16.msra.mxu0 0
    %418 = vmatprep.subr.bf16.mxu0 0
    %419 = vmatpush1.bf16.msra.mxu0 0
    %420 = vmatprep.subr.bf16.mxu0 0
    %421 = vmatpush1.bf16.msra.mxu0 0
    %422 = vmatprep.subr.bf16.mxu0 0
    %423 = vmatpush1.bf16.msra.mxu0 0
    %424 = vmatprep.subr.bf16.mxu0 0
    %425 = vmatpush1.bf16.msra.mxu0 0
    %426 = vmatprep.subr.bf16.mxu0 0
    %427 = vmatpush1.bf16.msra.mxu0 0
    %428 = vmatprep.subr.bf16.mxu0 0
    %429 = vmatpush1.bf16.msra.mxu0 0
    %430 = vmatprep.mubr.bf16.mxu0 0
    %431 = vmatmul.mubr.bf16.gmra.mrb[0].mxu0 %v393
    %v432 = vpop.f32.mrb[0].mxu0
    %v433 = vadd.f32 0.0, %v432
    %v434 = vpop.f32.mrb[0].mxu0
    %v435 = vpop.f32.mrb[0].mxu0
    %v436 = vadd.f32 0.0, %v435
    %v437 = vpop.f32.mrb[0].mxu0
    %438 = vmatprep.mubr.bf16.mxu0 0
    %439 = vmatmul.mubr.bf16.gmra.mrb[0].mxu0 %v396
    %v440 = vpop.f32.mrb[0].mxu0
    %v441 = vadd.f32 0.0, %v440
    %v442 = vpop.f32.mrb[0].mxu0
    %v443 = vpop.f32.mrb[0].mxu0
    %v444 = vadd.f32 0.0, %v443
    %v445 = vpop.f32.mrb[0].mxu0
    %446 = vdwg.mxu0
    %v447 = vpack.c.bf16 %v436, %v433
    %v448 = vpack.c.bf16 %v444, %v441
    %v449 = vlaneseq
    %v450 = vshrl.u32 %v449, 7
    %v451 = vsub.s32 4, %v450
    %v452 = vrot.slane %v48, %v451
    %453 = vmatprep.subr.bf16.mxu0 0
    %454 = vmatpush1.bf16.msra.mxu0 %v447
    %455 = vmatprep.subr.bf16.mxu0 0
    %456 = vmatpush1.bf16.msra.mxu0 %v448
    %457 = vmatprep.subr.bf16.mxu0 0
    %458 = vmatpush1.bf16.msra.mxu0 0
    %459 = vmatprep.subr.bf16.mxu0 0
    %460 = vmatpush1.bf16.msra.mxu0 0
    %461 = vmatprep.subr.bf16.mxu0 0
    %462 = vmatpush1.bf16.msra.mxu0 0
    %463 = vmatprep.subr.bf16.mxu0 0
    %464 = vmatpush1.bf16.msra.mxu0 0
    %465 = vmatprep.subr.bf16.mxu0 0
    %466 = vmatpush1.bf16.msra.mxu0 0
    %467 = vmatprep.subr.bf16.mxu0 0
    %468 = vmatpush1.bf16.msra.mxu0 0
    %469 = vmatprep.subr.bf16.mxu0 0
    %470 = vmatpush1.bf16.msra.mxu0 0
    %471 = vmatprep.subr.bf16.mxu0 0
    %472 = vmatpush1.bf16.msra.mxu0 0
    %473 = vmatprep.subr.bf16.mxu0 0
    %474 = vmatpush1.bf16.msra.mxu0 0
    %475 = vmatprep.subr.bf16.mxu0 0
    %476 = vmatpush1.bf16.msra.mxu0 0
    %477 = vmatprep.subr.bf16.mxu0 0
    %478 = vmatpush1.bf16.msra.mxu0 0
    %479 = vmatprep.subr.bf16.mxu0 0
    %480 = vmatpush1.bf16.msra.mxu0 0
    %481 = vmatprep.subr.bf16.mxu0 0
    %482 = vmatpush1.bf16.msra.mxu0 0
    %483 = vmatprep.subr.bf16.mxu0 0
    %484 = vmatpush1.bf16.msra.mxu0 0
    %485 = vmatprep.mubr.bf16.mxu0 0
    %486 = vmatmul.mubr.bf16.gmra.mrb[0].mxu0 %v91
    %v487 = vpop.f32.mrb[0].mxu0
    %v488 = vadd.f32 %v452, %v487
    %v489 = vpop.f32.mrb[0].mxu0
    %v490 = vpop.f32.mrb[0].mxu0
    %v491 = vadd.f32 %v452, %v490
    %v492 = vpop.f32.mrb[0].mxu0
    %493 = vmatprep.mubr.bf16.mxu0 0
    %494 = vmatmul.mubr.bf16.gmra.mrb[0].mxu0 %v94
    %v495 = vpop.f32.mrb[0].mxu0
    %v496 = vadd.f32 %v452, %v495
    %v497 = vpop.f32.mrb[0].mxu0
    %v498 = vpop.f32.mrb[0].mxu0
    %v499 = vadd.f32 %v452, %v498
    %v500 = vpop.f32.mrb[0].mxu0
    %501 = vdwg.mxu0
    %v502 = vpack.c.bf16 %v491, %v488
    %v503 = vpack.c.bf16 %v499, %v496
    %504 = vmatprep.subr.bf16.mxu0 0
    %505 = vmatpush1.bf16.msra.mxu0 %v502
    %506 = vmatprep.subr.bf16.mxu0 0
    %507 = vmatpush1.bf16.msra.mxu0 %v503
    %508 = vmatprep.subr.bf16.mxu0 0
    %509 = vmatpush1.bf16.msra.mxu0 0
    %510 = vmatprep.subr.bf16.mxu0 0
    %511 = vmatpush1.bf16.msra.mxu0 0
    %512 = vmatprep.subr.bf16.mxu0 0
    %513 = vmatpush1.bf16.msra.mxu0 0
    %514 = vmatprep.subr.bf16.mxu0 0
    %515 = vmatpush1.bf16.msra.mxu0 0
    %516 = vmatprep.subr.bf16.mxu0 0
    %517 = vmatpush1.bf16.msra.mxu0 0
    %518 = vmatprep.subr.bf16.mxu0 0
    %519 = vmatpush1.bf16.msra.mxu0 0
    %520 = vmatprep.subr.bf16.mxu0 0
    %521 = vmatpush1.bf16.msra.mxu0 0
    %522 = vmatprep.subr.bf16.mxu0 0
    %523 = vmatpush1.bf16.msra.mxu0 0
    %524 = vmatprep.subr.bf16.mxu0 0
    %525 = vmatpush1.bf16.msra.mxu0 0
    %526 = vmatprep.subr.bf16.mxu0 0
    %527 = vmatpush1.bf16.msra.mxu0 0
    %528 = vmatprep.subr.bf16.mxu0 0
    %529 = vmatpush1.bf16.msra.mxu0 0
    %530 = vmatprep.subr.bf16.mxu0 0
    %531 = vmatpush1.bf16.msra.mxu0 0
    %532 = vmatprep.subr.bf16.mxu0 0
    %533 = vmatpush1.bf16.msra.mxu0 0
    %534 = vmatprep.subr.bf16.mxu0 0
    %535 = vmatpush1.bf16.msra.mxu0 0
    %536 = vmatprep.mubr.bf16.mxu0 0
    %537 = vmatmul.mubr.bf16.gmra.mrb[0].mxu0 %v148
    %v538 = vpop.f32.mrb[0].mxu0
    %v539 = vadd.f32 0.0, %v538
    %v540 = vpop.f32.mrb[0].mxu0
    %v541 = vpop.f32.mrb[0].mxu0
    %v542 = vpop.f32.mrb[0].mxu0
    %543 = vdwg.mxu0
    %v544 = vpack.c.bf16 %v539, %v539
    %v546 = vsel %vm198, %v544, 0
    %548 = vmatprep.subr.bf16.mxu0 0
    %549 = vmatpush1.bf16.msra.mxu0 %v546
    %550 = vmatprep.subr.bf16.mxu0 0
    %551 = vmatpush1.bf16.msra.mxu0 0
    %552 = vmatprep.subr.bf16.mxu0 0
    %553 = vmatpush1.bf16.msra.mxu0 0
    %554 = vmatprep.subr.bf16.mxu0 0
    %555 = vmatpush1.bf16.msra.mxu0 0
    %556 = vmatprep.subr.bf16.mxu0 0
    %557 = vmatpush1.bf16.msra.mxu0 0
    %558 = vmatprep.subr.bf16.mxu0 0
    %559 = vmatpush1.bf16.msra.mxu0 0
    %560 = vmatprep.subr.bf16.mxu0 0
    %561 = vmatpush1.bf16.msra.mxu0 0
    %562 = vmatprep.subr.bf16.mxu0 0
    %563 = vmatpush1.bf16.msra.mxu0 0
    %564 = vmatprep.subr.bf16.mxu0 0
    %565 = vmatpush1.bf16.msra.mxu0 0
    %566 = vmatprep.subr.bf16.mxu0 0
    %567 = vmatpush1.bf16.msra.mxu0 0
    %568 = vmatprep.subr.bf16.mxu0 0
    %569 = vmatpush1.bf16.msra.mxu0 0
    %570 = vmatprep.subr.bf16.mxu0 0
    %571 = vmatpush1.bf16.msra.mxu0 0
    %572 = vmatprep.subr.bf16.mxu0 0
    %573 = vmatpush1.bf16.msra.mxu0 0
    %574 = vmatprep.subr.bf16.mxu0 0
    %575 = vmatpush1.bf16.msra.mxu0 0
    %576 = vmatprep.subr.bf16.mxu0 0
    %577 = vmatpush1.bf16.msra.mxu0 0
    %578 = vmatprep.subr.bf16.mxu0 0
    %579 = vmatpush1.bf16.msra.mxu0 0
    %580 = vmatprep.mubr.bf16.mxu0 0
    %581 = vmatmul.mubr.bf16.gmra.mrb[0].mxu0 %v193
    %v582 = vpop.f32.mrb[0].mxu0
    %v583 = vadd.f32 0.0, %v582
    %v584 = vpop.f32.mrb[0].mxu0
    %v585 = vpop.f32.mrb[0].mxu0
    %v586 = vadd.f32 0.0, %v585
    %v587 = vpop.f32.mrb[0].mxu0
    %588 = vmatprep.mubr.bf16.mxu0 0
    %589 = vmatmul.mubr.bf16.gmra.mrb[0].mxu0 %v196
    %v590 = vpop.f32.mrb[0].mxu0
    %v591 = vadd.f32 0.0, %v590
    %v592 = vpop.f32.mrb[0].mxu0
    %v593 = vpop.f32.mrb[0].mxu0
    %v594 = vadd.f32 0.0, %v593
    %v595 = vpop.f32.mrb[0].mxu0
    %596 = vdwg.mxu0
    %v597 = vlaneseq
    %v598 = vshrl.u32 %v597, 7
    %v599 = vsub.s32 7, %v598
    %v600 = vrot.slane %v48, %v599
    %v601 = vmul.f32 %v600, %v583
    %v602 = vmul.f32 %v600, %v586
    %v603 = vmul.f32 %v600, %v591
    %v604 = vmul.f32 %v600, %v594
    %v605 = vsub.f32 %v488, %v601
    %v606 = vsub.f32 %v491, %v602
    %v607 = vsub.f32 %v496, %v603
    %v608 = vsub.f32 %v499, %v604
    %v609 = vmul.f32 %v605, %v605
    %v610 = vmul.f32 %v606, %v606
    %v611 = vmul.f32 %v607, %v607
    %v612 = vmul.f32 %v608, %v608
    %v613 = vpack.c.bf16 %v610, %v609
    %v614 = vpack.c.bf16 %v612, %v611
    %615 = vmatprep.subr.bf16.mxu0 0
    %616 = vmatpush1.bf16.msra.mxu0 %v613
    %617 = vmatprep.subr.bf16.mxu0 0
    %618 = vmatpush1.bf16.msra.mxu0 %v614
    %619 = vmatprep.subr.bf16.mxu0 0
    %620 = vmatpush1.bf16.msra.mxu0 0
    %621 = vmatprep.subr.bf16.mxu0 0
    %622 = vmatpush1.bf16.msra.mxu0 0
    %623 = vmatprep.subr.bf16.mxu0 0
    %624 = vmatpush1.bf16.msra.mxu0 0
    %625 = vmatprep.subr.bf16.mxu0 0
    %626 = vmatpush1.bf16.msra.mxu0 0
    %627 = vmatprep.subr.bf16.mxu0 0
    %628 = vmatpush1.bf16.msra.mxu0 0
    %629 = vmatprep.subr.bf16.mxu0 0
    %630 = vmatpush1.bf16.msra.mxu0 0
    %631 = vmatprep.subr.bf16.mxu0 0
    %632 = vmatpush1.bf16.msra.mxu0 0
    %633 = vmatprep.subr.bf16.mxu0 0
    %634 = vmatpush1.bf16.msra.mxu0 0
    %635 = vmatprep.subr.bf16.mxu0 0
    %636 = vmatpush1.bf16.msra.mxu0 0
    %637 = vmatprep.subr.bf16.mxu0 0
    %638 = vmatpush1.bf16.msra.mxu0 0
    %639 = vmatprep.subr.bf16.mxu0 0
    %640 = vmatpush1.bf16.msra.mxu0 0
    %641 = vmatprep.subr.bf16.mxu0 0
    %642 = vmatpush1.bf16.msra.mxu0 0
    %643 = vmatprep.subr.bf16.mxu0 0
    %644 = vmatpush1.bf16.msra.mxu0 0
    %645 = vmatprep.subr.bf16.mxu0 0
    %646 = vmatpush1.bf16.msra.mxu0 0
    %647 = vmatprep.mubr.bf16.mxu0 0
    %648 = vmatmul.mubr.bf16.gmra.mrb[0].mxu0 %v148
    %v649 = vpop.f32.mrb[0].mxu0
    %v650 = vadd.f32 0.0, %v649
    %v651 = vpop.f32.mrb[0].mxu0
    %v652 = vpop.f32.mrb[0].mxu0
    %v653 = vpop.f32.mrb[0].mxu0
    %654 = vdwg.mxu0
    %v655 = vpack.c.bf16 %v650, %v650
    %v657 = vsel %vm198, %v655, 0
    %659 = vmatprep.subr.bf16.mxu0 0
    %660 = vmatpush1.bf16.msra.mxu0 %v657
    %661 = vmatprep.subr.bf16.mxu0 0
    %662 = vmatpush1.bf16.msra.mxu0 0
    %663 = vmatprep.subr.bf16.mxu0 0
    %664 = vmatpush1.bf16.msra.mxu0 0
    %665 = vmatprep.subr.bf16.mxu0 0
    %666 = vmatpush1.bf16.msra.mxu0 0
    %667 = vmatprep.subr.bf16.mxu0 0
    %668 = vmatpush1.bf16.msra.mxu0 0
    %669 = vmatprep.subr.bf16.mxu0 0
    %670 = vmatpush1.bf16.msra.mxu0 0
    %671 = vmatprep.subr.bf16.mxu0 0
    %672 = vmatpush1.bf16.msra.mxu0 0
    %673 = vmatprep.subr.bf16.mxu0 0
    %674 = vmatpush1.bf16.msra.mxu0 0
    %675 = vmatprep.subr.bf16.mxu0 0
    %676 = vmatpush1.bf16.msra.mxu0 0
    %677 = vmatprep.subr.bf16.mxu0 0
    %678 = vmatpush1.bf16.msra.mxu0 0
    %679 = vmatprep.subr.bf16.mxu0 0
    %680 = vmatpush1.bf16.msra.mxu0 0
    %681 = vmatprep.subr.bf16.mxu0 0
    %682 = vmatpush1.bf16.msra.mxu0 0
    %683 = vmatprep.subr.bf16.mxu0 0
    %684 = vmatpush1.bf16.msra.mxu0 0
    %685 = vmatprep.subr.bf16.mxu0 0
    %686 = vmatpush1.bf16.msra.mxu0 0
    %687 = vmatprep.subr.bf16.mxu0 0
    %688 = vmatpush1.bf16.msra.mxu0 0
    %689 = vmatprep.subr.bf16.mxu0 0
    %690 = vmatpush1.bf16.msra.mxu0 0
    %691 = vmatprep.mubr.bf16.mxu0 0
    %692 = vmatmul.mubr.bf16.gmra.mrb[0].mxu0 %v193
    %v693 = vpop.f32.mrb[0].mxu0
    %v694 = vadd.f32 1e-05, %v693
    %v695 = vpop.f32.mrb[0].mxu0
    %v696 = vpop.f32.mrb[0].mxu0
    %v697 = vadd.f32 1e-05, %v696
    %v698 = vpop.f32.mrb[0].mxu0
    %699 = vmatprep.mubr.bf16.mxu0 0
    %700 = vmatmul.mubr.bf16.gmra.mrb[0].mxu0 %v196
    %v701 = vpop.f32.mrb[0].mxu0
    %v702 = vadd.f32 1e-05, %v701
    %v703 = vpop.f32.mrb[0].mxu0
    %v704 = vpop.f32.mrb[0].mxu0
    %v705 = vadd.f32 1e-05, %v704
    %v706 = vpop.f32.mrb[0].mxu0
    %707 = vdwg.mxu0
    %v708 = vrsqrt.pop %v694
    %v709 = vrsqrt.pop %v697
    %v710 = vrsqrt.pop %v702
    %v711 = vrsqrt.pop %v705
    %v712 = vmul.f32 %v605, %v708
    %v713 = vmul.f32 %v606, %v709
    %v714 = vmul.f32 %v607, %v710
    %v715 = vmul.f32 %v608, %v711
    %v716 = vlaneseq
    %v717 = vshrl.u32 %v716, 7
    %v718 = vsub.s32 5, %v717
    %v719 = vrot.slane %v48, %v718
    %v720 = vmul.f32 %v712, %v719
    %v721 = vmul.f32 %v713, %v719
    %v722 = vmul.f32 %v714, %v719
    %v723 = vmul.f32 %v715, %v719
    %v724 = vlaneseq
    %v725 = vshrl.u32 %v724, 7
    %v726 = vsub.s32 6, %v725
    %v727 = vrot.slane %v48, %v726
    %v728 = vadd.f32 %v720, %v727
    %v729 = vadd.f32 %v721, %v727
    %v730 = vadd.f32 %v722, %v727
    %v731 = vadd.f32 %v723, %v727
    %v732 = vmax.f32 %v728, 0.0
    %v733 = vmax.f32 %v729, 0.0
    %v734 = vmax.f32 %v730, 0.0
    %v735 = vmax.f32 %v731, 0.0
    %v736 = vpack.c.bf16 %v733, %v732
    %v737 = vpack.c.bf16 %v735, %v734
    %v738 = vlaneseq
    %v739 = vshrl.u32 %v738, 7
    %v740 = vsub.s32 0, %v739
    %v741 = vrot.slane %v55, %v740
    %vm742 = vcmask 130048
    %v744 = vsel %vm742, %v736, 0
    %v747 = vsel %vm742, %v737, 0
    %749 = vmatprep.subr.bf16.mxu0 0
    %750 = vmatpush1.bf16.msra.mxu0 %v58
    %751 = vmatprep.subr.bf16.mxu0 0
    %752 = vmatpush1.bf16.msra.mxu0 0
    %753 = vmatprep.subr.bf16.mxu0 0
    %754 = vmatpush1.bf16.msra.mxu0 0
    %755 = vmatprep.subr.bf16.mxu0 0
    %756 = vmatpush1.bf16.msra.mxu0 0
    %757 = vmatprep.subr.bf16.mxu0 0
    %758 = vmatpush1.bf16.msra.mxu0 0
    %759 = vmatprep.subr.bf16.mxu0 0
    %760 = vmatpush1.bf16.msra.mxu0 0
    %761 = vmatprep.subr.bf16.mxu0 0
    %762 = vmatpush1.bf16.msra.mxu0 0
    %763 = vmatprep.subr.bf16.mxu0 0
    %764 = vmatpush1.bf16.msra.mxu0 0
    %765 = vmatprep.subr.bf16.mxu0 0
    %766 = vmatpush1.bf16.msra.mxu0 0
    %767 = vmatprep.subr.bf16.mxu0 0
    %768 = vmatpush1.bf16.msra.mxu0 0
    %769 = vmatprep.subr.bf16.mxu0 0
    %770 = vmatpush1.bf16.msra.mxu0 0
    %771 = vmatprep.subr.bf16.mxu0 0
    %772 = vmatpush1.bf16.msra.mxu0 0
    %773 = vmatprep.subr.bf16.mxu0 0
    %774 = vmatpush1.bf16.msra.mxu0 0
    %775 = vmatprep.subr.bf16.mxu0 0
    %776 = vmatpush1.bf16.msra.mxu0 0
    %777 = vmatprep.subr.bf16.mxu0 0
    %778 = vmatpush1.bf16.msra.mxu0 0
    %779 = vmatprep.subr.bf16.mxu0 0
    %780 = vmatpush1.bf16.msra.mxu0 0
    %781 = vmatprep.mubr.bf16.mxu0 0
    %782 = vmatmul.mubr.bf16.gmra.mrb[0].mxu0 %v744
    %v783 = vpop.f32.mrb[0].mxu0
    %v784 = vadd.f32 %v741, %v783
    %v785 = vpop.f32.mrb[0].mxu0
    %v786 = vpop.f32.mrb[0].mxu0
    %v787 = vadd.f32 %v741, %v786
    %v788 = vpop.f32.mrb[0].mxu0
    %789 = vmatprep.mubr.bf16.mxu0 0
    %790 = vmatmul.mubr.bf16.gmra.mrb[0].mxu0 %v747
    %v791 = vpop.f32.mrb[0].mxu0
    %v792 = vadd.f32 %v741, %v791
    %v793 = vpop.f32.mrb[0].mxu0
    %v794 = vpop.f32.mrb[0].mxu0
    %v795 = vadd.f32 %v741, %v794
    %v796 = vpop.f32.mrb[0].mxu0
    %797 = vdwg.mxu0
    %798 = vst [vmem:[#allocation5] sm:$0xff] %v784
    %799 = vst [vmem:[#allocation5 + $0x8] sm:$0xff] %v787
    %800 = vst [vmem:[#allocation5 + $0x10] sm:$0xff] %v792
    %801 = vst [vmem:[#allocation5 + $0x18] sm:$0xff] %v795
    // Predicated region
    $region26: #{tpu_custom_call.1} parent=1 // pred_check
      _
    $region27: #{tpu_custom_call.1} parent=1 // pred_check_branch
      %803 = sbr.rel (0) target = $region29
    $region28: #{tpu_custom_call.1} parent=1 // pred_region
      %s805 = ssub.s32 512, 512
      %806 = vsyncadd [#allocation4], %s805
      %s807 = sshll.u32 [#allocation5], 4
      %s808 = int_to_ptr.vmem [resolvable:$true] %s807
      %813 = dma.vmem_to_hbm [thread:$0]  %s808, 512, %s5, [#allocation4], 128, 128, 8
    $region29: #{tpu_custom_call.1} parent=1 // pred_fallthru
      _
    // Predicated region
    $region30: #{tpu_custom_call.1} parent=1 // pred_check
      _
    $region31: #{tpu_custom_call.1} parent=1 // pred_check_branch
      %815 = sbr.rel (0) target = $region33
    $region32: #{tpu_custom_call.1} parent=1 // pred_region
      %816 = dma.done [#allocation4], 512
    $region33: #{tpu_custom_call.1} parent=1 // pred_fallthru
      _
    %817 = vsyncpa [#allocation3], 1
    %818 = vsyncpa [#allocation4], 1

</llo_original>
